<compile_context>
chip_gen: v7x
topology: tpu7x:2x2x1
jax: 0.10.0
libtpu: 0.0.40
codegen_flags: <defaults>
</compile_context>

<pallas_src>
import jax
import jax.numpy as jnp
from jax import lax
from jax.experimental import pallas as pl
from jax.experimental.pallas import tpu as pltpu


def _round_up(a, m):
    return (a + m - 1) // m * m


def _vmem_capacity_bytes() -> int:
    """Physical VMEM per core; conservative fallback = v7x's 64 MiB/TC."""
    try:
        return int(pltpu.get_tpu_info().vmem_capacity_bytes)
    except Exception:
        return 64 * 1024 * 1024


def _make_group_sort_kernel(group_size, hw, chunk, row_steps, lane_chunk,
                            descending):
    # Static lane windows covering each group segment (last may be short).
    lane_windows = []
    c0 = 0
    while c0 < hw:
        lane_windows.append((c0, min(lane_chunk, hw - c0)))
        c0 += lane_chunk

    def sort_network(rows):
        # Odd-even transposition: group_size passes fully sort g values.
        for p in range(group_size):
            for i in range(p % 2, group_size - 1, 2):
                a, b = rows[i], rows[i + 1]
                lo = jnp.minimum(a, b)
                hi = jnp.maximum(a, b)
                rows[i], rows[i + 1] = (hi, lo) if descending else (lo, hi)
        return rows

    def kernel(x_ref, o_ref):
        # x_ref / o_ref: (tile_ng, group_size * hw) VMEM blocks.
        def body(s, carry):
            r0 = s * chunk
            if not isinstance(r0, int):
                r0 = pl.multiple_of(r0, chunk)
            for (c, w) in lane_windows:
                rows = [
                    x_ref[pl.ds(r0, chunk), pl.ds(i * hw + c, w)]
                    for i in range(group_size)
                ]
                rows = sort_network(rows)
                for i in range(group_size):
                    o_ref[pl.ds(r0, chunk), pl.ds(i * hw + c, w)] = rows[i]
            return carry

        if row_steps == 1:
            body(0, 0)
        else:
            lax.fori_loop(0, row_steps, body, 0,
                          unroll=True if row_steps <= 4 else 2)

    return kernel


def group_sort(x, group_size: int, descending: bool = False,
               donate_input: bool = False):
    """Pallas GroupSort forward.  x is NCHW (B, C, H, W)."""
    B, C, H, W = x.shape
    assert C % group_size == 0
    g = group_size
    n_groups = B * (C // g)
    hw = H * W
    itemsize = jnp.dtype(x.dtype).itemsize
    row_width = g * hw
    row_bytes = row_width * itemsize

    # Free, contiguous view of NCHW: one row per group.  No padding, so no
    # extra HBM passes; unaligned hw only costs in-kernel lane shuffles.
    xr = x.reshape(n_groups, row_width)

    # ---- sizing --------------------------------------------------------
    sublane = {4: 8, 2: 16, 1: 32}.get(itemsize, 8)  # dtype-native sublane tile
    VREG_BUDGET = 96 * 1024        # live comparator bytes (vreg file = 256 KiB)
    PER_BUF = 2 * 1024 * 1024      # ~2 MiB blocks: mem-bound sweet spot
    TARGET_STEPS = 8               # enough grid steps to pipeline / megacore

    # Lane chunk bounds the per-slab lane extent so the g live slabs of
    # (chunk, lane_chunk) stay within vregs even for large H*W.
    lane_eff = _round_up(hw, 128)
    lane_cap = max(128, (VREG_BUDGET // (g * sublane * itemsize)) // 128 * 128)
    if lane_eff <= lane_cap:
        lane_chunk = hw
        chunk_cap = max(sublane,
                        (VREG_BUDGET // (g * lane_eff * itemsize))
                        // sublane * sublane)
    else:
        lane_chunk = lane_cap
        chunk_cap = sublane
    # TODO(synk): very large H*W with very few groups would additionally
    # benefit from a lane-axis grid split (second grid dim over hw).

    if n_groups <= sublane:
        tile_ng = n_groups            # block dim == full array dim (allowed)
        chunk = n_groups
    else:
        t_vmem = max(sublane, (PER_BUF // row_bytes) // sublane * sublane)
        t_grid = max(sublane,
                     _round_up(pl.cdiv(n_groups, TARGET_STEPS), sublane))
        t_need = _round_up(n_groups, sublane)
        tile_ng = max(sublane, min(t_vmem, t_grid, t_need))
        chunk = max(sublane, min(chunk_cap, tile_ng))
        tile_ng = max(chunk, (tile_ng // chunk) * chunk)
    row_steps = max(1, tile_ng // chunk)
    grid = (pl.cdiv(n_groups, tile_ng),)

    block_bytes = tile_ng * row_bytes
    cap = _vmem_capacity_bytes()
    # 2 in + 2 out double-buffered blocks + Mosaic internal scratch headroom;
    # stay well inside VMEM (v7x has only 64 MiB per core).
    vmem_limit = min(int(cap * 0.75),
                     max(32 * 1024 * 1024, 4 * block_bytes + (8 << 20)))

    n_cmp = sum(len(range(p % 2, g - 1, 2)) for p in range(g))
    cost = pl.CostEstimate(
        flops=2 * n_cmp * n_groups * hw,
        transcendentals=0,
        bytes_accessed=2 * n_groups * row_width * itemsize,  # actual DMA bytes
    )

    kernel = _make_group_sort_kernel(g, hw, chunk, row_steps, lane_chunk,
                                     descending)
    out = pl.pallas_call(
        kernel,
        out_shape=jax.ShapeDtypeStruct((n_groups, row_width), x.dtype),
        grid_spec=pltpu.PrefetchScalarGridSpec(
            num_scalar_prefetch=0,
            grid=grid,
            in_specs=[pl.BlockSpec((tile_ng, row_width), lambda i: (i, 0))],
            out_specs=pl.BlockSpec((tile_ng, row_width), lambda i: (i, 0)),
        ),
        compiler_params=pltpu.CompilerParams(
            dimension_semantics=("parallel",),   # megacore split on v7x
            vmem_limit_bytes=vmem_limit,
        ),
        cost_estimate=cost,
        # Only alias when the caller donates x; otherwise XLA would insert a
        # defensive copy (an extra HBM pass).
        input_output_aliases={0: 0} if donate_input else {},
    )(xr)

    return out.reshape(B, C, H, W)


def _reference(x, group_size, descending):
    B, C, H, W = x.shape
    r = jnp.sort(x.reshape(B, C // group_size, group_size, H, W), axis=2)
    if descending:
        r = jnp.flip(r, axis=2)
    return r.reshape(B, C, H, W)


if __name__ == "__main__":
    key = jax.random.PRNGKey(0)
    k1, k2 = jax.random.split(key)

    # Test 1: small shape implied by the module (lane-aligned H*W = 256).
    x1 = jax.random.normal(k1, (2, 4, 16, 16), dtype=jnp.float32)
    # Test 2: larger group, unaligned H*W (=64, no padding now), multi-block
    # grid (5 steps) exercising the pipelined / megacore path.
    x2 = jax.random.normal(k2, (5, 64, 8, 8), dtype=jnp.float32)

    for x, g in ((x1, 2), (x2, 4)):
        for descending in (False, True):
            y = jax.block_until_ready(group_sort(x, g, descending=descending))
            ref = _reference(x, g, descending)
            assert y.shape == x.shape and y.dtype == x.dtype
            assert jnp.allclose(y, ref), (
                f"Pallas GroupSort mismatch (g={g}, descending={descending})")

    # TODO(synk): GroupSort.lc_forward is an auxiliary helper (not part of
    # forward) and is intentionally not implemented here.
    print("KERNEL_OK")
</pallas_src>

<mosaic_0001>
module attributes {stable_mosaic.version = 11 : i64} {
  func.func @kernel(%arg0: i32, %arg1: memref<4x512xf32, #tpu.memory_space<vmem>>, %arg2: memref<4x512xf32, #tpu.memory_space<vmem>>) attributes {dimension_semantics = [#tpu.dimension_semantics<parallel>], iteration_bounds = array<i64: 1>, scalar_prefetch = 0 : i64, scratch_operands = 0 : i64, tpu.core_type = #tpu.core_type<tc>, window_params = [{transform_indices = @transform_0, window_bounds = array<i64: 4, 512>}, {transform_indices = @transform_1, window_bounds = array<i64: 4, 512>}]} {
    %c0 = arith.constant 0 : index
    %c0_0 = arith.constant 0 : index
    %0 = vector.load %arg1[%c0, %c0_0] : memref<4x512xf32, #tpu.memory_space<vmem>>, vector<4x256xf32>
    %c0_1 = arith.constant 0 : index
    %c256 = arith.constant 256 : index
    %1 = vector.load %arg1[%c0_1, %c256] : memref<4x512xf32, #tpu.memory_space<vmem>>, vector<4x256xf32>
    %2 = arith.minimumf %0, %1 : vector<4x256xf32>
    %3 = arith.maximumf %0, %1 : vector<4x256xf32>
    %c0_2 = arith.constant 0 : index
    %c0_3 = arith.constant 0 : index
    %4 = vector.load %arg2[%c0_2, %c0_3] : memref<4x512xf32, #tpu.memory_space<vmem>>, vector<4x256xf32>
    tpu.vector_store %arg2[%c0_2, %c0_3], %2 {strides = array<i32>} : memref<4x512xf32, #tpu.memory_space<vmem>>, vector<4x256xf32>,
    %c0_4 = arith.constant 0 : index
    %c256_5 = arith.constant 256 : index
    %5 = vector.load %arg2[%c0_4, %c256_5] : memref<4x512xf32, #tpu.memory_space<vmem>>, vector<4x256xf32>
    tpu.vector_store %arg2[%c0_4, %c256_5], %3 {strides = array<i32>} : memref<4x512xf32, #tpu.memory_space<vmem>>, vector<4x256xf32>,
    return
  }
  func.func @transform_0(%arg0: i32) -> (i32, i32) {
    %c0_i32 = arith.constant 0 : i32
    %c0_i32_0 = arith.constant 0 : i32
    return %arg0, %c0_i32 : i32, i32
  }
  func.func @transform_1(%arg0: i32) -> (i32, i32) {
    %c0_i32 = arith.constant 0 : i32
    %c0_i32_0 = arith.constant 0 : i32
    return %arg0, %c0_i32 : i32, i32
  }
}

</mosaic_0001>

<llo_original>
// kernel: tpu_custom_call.1
$region0: #{tpu_custom_call.1}
  #allocation0 [shape = 'u32[]', space=smem, size = 0x4, offset = 0x4, fixed_abs, tag = 'smem constant byte address 0x4 - core index']
  #allocation1 [shape = 'u32[144,128]{1,0:T(1,128)}', space=vmem, size = 0x12000, scoped, tag = 'internal scratch']
  %s0 = inlined_call_operand.hbm [shape: f32[4,512], index: 0, kind: input, shape index: {}]
  %s1 = inlined_call_operand.hbm [shape: f32[4,512], index: 1, kind: output, shape index: {}]
  %s2 = sld [smem:[#allocation0]]
  $region18: #{tpu_custom_call.1} parent=0
    _
  %s4 = ssub.s32 1, %s2
  %s5 = scalar_select 0, %s4, %s2
  $region1: #{tpu_custom_call.1} parent=0
    #allocation2 [shape = 'u8[8192]{0}', space=vmem, size = 0x2000, scoped, tag = 'input window, operand 0, single buffered']
    #allocation3 [shape = 's32[1]{0}', space=sflag, size = 0x4, scoped, tag = 'scoped memory for tpu_custom_call.1']
    #allocation4 [shape = 's32[1]{0}', space=sflag, size = 0x4, scoped, tag = 'scoped memory for tpu_custom_call.1']
    #allocation5 [shape = 'u8[8192]{0}', space=vmem, size = 0x2000, scoped, tag = 'output window, operand 0, single buffered']
    %6 = vsyncpa [#allocation3], 0
    %7 = vsyncpa [#allocation4], 0
    // Predicated region
    $region2: #{tpu_custom_call.1} parent=1 // pred_check
      _
    $region3: #{tpu_custom_call.1} parent=1 // pred_check_branch
      %9 = sbr.rel (0) target = $region5
    $region4: #{tpu_custom_call.1} parent=1 // pred_region
      %s11 = ssub.s32 256, 256
      %12 = vsyncadd [#allocation3], %s11
      %s14 = sshll.u32 [#allocation2], 4
      %s15 = int_to_ptr.vmem [resolvable:$true] %s14
      %17 = dma.hbm_to_vmem [thread:$0]  %s0, 256, %s15, [#allocation3]
    $region5: #{tpu_custom_call.1} parent=1 // pred_fallthru
      _
    // Predicated region
    $region6: #{tpu_custom_call.1} parent=1 // pred_check
      _
    $region7: #{tpu_custom_call.1} parent=1 // pred_check_branch
      %19 = sbr.rel (0) target = $region9
    $region8: #{tpu_custom_call.1} parent=1 // pred_region
      %20 = dma.done [#allocation3], 256
    $region9: #{tpu_custom_call.1} parent=1 // pred_fallthru
      _
    %v21 = vld [vmem:[#allocation2] sm:$0xff]
    %v22 = vld [vmem:[#allocation2 + $0x8] sm:$0xff]
    %v23 = vmin.f32 %v21, %v22
    %v24 = vmax.f32 %v21, %v22
    %25 = vst [vmem:[#allocation5] sm:$0xff] %v23
    %26 = vst [vmem:[#allocation5 + $0x8] sm:$0xff] %v24
    // Predicated region
    $region10: #{tpu_custom_call.1} parent=1 // pred_check
      _
    $region11: #{tpu_custom_call.1} parent=1 // pred_check_branch
      %28 = sbr.rel (0) target = $region13
    $region12: #{tpu_custom_call.1} parent=1 // pred_region
      %s30 = ssub.s32 256, 256
      %31 = vsyncadd [#allocation4], %s30
      %s33 = sshll.u32 [#allocation5], 4
      %s34 = int_to_ptr.vmem [resolvable:$true] %s33
      %36 = dma.vmem_to_hbm [thread:$0]  %s34, 256, %s1, [#allocation4]
    $region13: #{tpu_custom_call.1} parent=1 // pred_fallthru
      _
    // Predicated region
    $region14: #{tpu_custom_call.1} parent=1 // pred_check
      _
    $region15: #{tpu_custom_call.1} parent=1 // pred_check_branch
      %38 = sbr.rel (0) target = $region17
    $region16: #{tpu_custom_call.1} parent=1 // pred_region
      %39 = dma.done [#allocation4], 256
    $region17: #{tpu_custom_call.1} parent=1 // pred_fallthru
      _
    %40 = vsyncpa [#allocation3], 1
    %41 = vsyncpa [#allocation4], 1

</llo_original>
